<compile_context>
chip_gen: v6e
topology: v6e:2x2x1
jax: 0.10.0
libtpu: 0.0.40
codegen_flags: <defaults>
</compile_context>

<pallas_src>
import functools

import numpy as np

import jax
import jax.numpy as jnp
from jax.experimental import pallas as pl
from jax.experimental.pallas import tpu as pltpu


def _edge_map_kernel(img_ref, hmap_ref, wmap_ref, out_ref, acc_ref, *,
                     H, W, inv_denom):
    """One grid step = one image (C, H*W); accumulates sum(edge) into SMEM."""
    f32 = jnp.float32
    step = pl.program_id(0)

    @pl.when(step == 0)
    def _init():
        acc_ref[0] = f32(0.0)

    x = img_ref[...]                        # (C, H*W), lane-dense
    if x.dtype != jnp.float32:
        x = x.astype(jnp.float32)
    hmap = hmap_ref[...]                    # (1, H*W) int32: lane -> row index
    wmap = wmap_ref[...]                    # (1, H*W) int32: lane -> col index

    # ---- W-direction differences (gradY): neighbour is 1 lane away -------
    # Data and index maps are rolled by the same amount, so each lane holds a
    # known unordered pixel pair regardless of the hardware rotate direction
    # (|a - b| is symmetric in the pair).
    x_r = pltpu.roll(x, shift=1, axis=1)
    h_r = pltpu.roll(hmap, shift=1, axis=1)
    w_r = pltpu.roll(wmap, shift=1, axis=1)
    dw = w_r - wmap
    valid_y = (h_r == hmap) & ((dw == 1) | (dw == -1))   # same row, adjacent cols
    j_w = jnp.minimum(wmap, w_r)                         # PyTorch grady col index
    wy = valid_y.astype(f32) * (
        f32(1.0) + f32(0.5) * ((j_w == 0).astype(f32)
                               + (j_w == W - 2).astype(f32)))
    part_y = jnp.sum(jnp.abs(x_r - x) * wy)              # == sum(gradY) for image

    # ---- H-direction differences (gradX): neighbour is W lanes away ------
    x_r = pltpu.roll(x, shift=W, axis=1)
    h_r = pltpu.roll(hmap, shift=W, axis=1)
    w_r = pltpu.roll(wmap, shift=W, axis=1)
    dh = h_r - hmap
    valid_x = (w_r == wmap) & ((dh == 1) | (dh == -1))   # same col, adjacent rows
    j_h = jnp.minimum(hmap, h_r)                         # PyTorch gradx row index
    wx = valid_x.astype(f32) * (
        f32(1.0) + f32(0.5) * ((j_h == 0).astype(f32)
                               + (j_h == H - 2).astype(f32)))
    part_x = jnp.sum(jnp.abs(x_r - x) * wx)              # == sum(gradX) for image

    acc_ref[0] = acc_ref[0] + part_x + part_y

    @pl.when(step == pl.num_programs(0) - 1)
    def _finalize():
        out_ref[0, 0] = acc_ref[0] * f32(inv_denom)


def edge_map_loss(img, scale=1.0):
    """Pallas implementation of EdgeMap.forward (returns the scalar L1 loss)."""
    scale = float(scale)
    if scale == 0.0:
        raise ValueError("scale must be nonzero")
    N, C, H, W = img.shape
    if H < 3:
        raise ValueError("edge_map_loss requires H >= 3")
    HW = H * W

    # Lane-dense layout: all H*W pixels of a row-major image go on lanes.
    img_flat = img.reshape(N, C, HW)

    # Static flat-lane -> (row, col) maps, built on the host (keeps integer
    # div/mod out of the kernel).
    flat = np.arange(HW, dtype=np.int32)
    hmap = jnp.asarray((flat // W).reshape(1, HW))
    wmap = jnp.asarray((flat % W).reshape(1, HW))

    # |x/s| == |x|/|s| and the L1 target is zero, so fold the scale and the
    # mean divisor (edge has N*1*H*W elements) into one final scalar multiply.
    inv_denom = 1.0 / (float(N) * float(H) * float(W) * abs(scale))

    kernel = functools.partial(_edge_map_kernel, H=H, W=W, inv_denom=inv_denom)

    itemsize = jnp.dtype(img.dtype).itemsize
    in_block_bytes = C * HW * itemsize
    # Double-buffered input block + fp32 working set + tiny index maps;
    # clamp to a range safe from v5e (16 MiB scoped default) to v7x (64 MiB
    # physical VMEM).
    vmem_limit = int(min(max(2 * in_block_bytes + 6 * C * HW * 4 + 8 * HW
                             + (1 << 20), 16 << 20), 48 << 20))

    cost = pl.CostEstimate(
        flops=8 * N * C * HW,
        transcendentals=0,
        bytes_accessed=N * C * HW * itemsize + 2 * HW * 4 + 4,
    )

    # TODO(synk): for single images too large for one VMEM block, add H-slab
    # tiling with a one-row halo (needs pl.Element / manual DMA for overlap).
    grid_spec = pltpu.PrefetchScalarGridSpec(
        num_scalar_prefetch=0,
        grid=(N,),
        in_specs=[
            pl.BlockSpec((None, C, HW), lambda n: (n, 0, 0)),  # one image / step
            pl.BlockSpec((1, HW), lambda n: (0, 0)),           # hmap (resident)
            pl.BlockSpec((1, HW), lambda n: (0, 0)),           # wmap (resident)
        ],
        out_specs=pl.BlockSpec((1, 1), lambda n: (0, 0),
                               memory_space=pltpu.MemorySpace.SMEM),
        scratch_shapes=[pltpu.SMEM((1,), jnp.float32)],
    )

    out = pl.pallas_call(
        kernel,
        out_shape=jax.ShapeDtypeStruct((1, 1), jnp.float32),
        grid_spec=grid_spec,
        compiler_params=pltpu.CompilerParams(
            # The N axis accumulates into shared SMEM scratch -> "arbitrary".
            dimension_semantics=("arbitrary",),
            vmem_limit_bytes=vmem_limit,
        ),
        cost_estimate=cost,
    )(img_flat, hmap, wmap)
    return out[0, 0]


def _edge_map_loss_ref(img, scale=1.0):
    """Pure-JAX reference mirroring the PyTorch forward exactly."""
    img = img / scale
    N, C, H, W = img.shape
    gradx = jnp.abs(img[:, :, 1:, :] - img[:, :, :-1, :]).sum(axis=1,
                                                              keepdims=True)
    grady = jnp.abs(img[:, :, :, 1:] - img[:, :, :, :-1]).sum(axis=1,
                                                              keepdims=True)
    gradX = jnp.zeros((N, 1, H, W), img.dtype)
    gradY = jnp.zeros((N, 1, H, W), img.dtype)
    gradX = gradX.at[:, :, :-1, :].add(gradx)
    gradX = gradX.at[:, :, 1:, :].add(gradx)
    gradX = gradX.at[:, :, 1:-1, :].divide(2)
    gradY = gradY.at[:, :, :, :-1].add(grady)
    gradY = gradY.at[:, :, :, 1:].add(grady)
    gradY = gradY.at[:, :, :, 1:-1].divide(2)
    edge = gradX + gradY
    return jnp.mean(jnp.abs(edge))   # target is zeros


if __name__ == "__main__":
    key = jax.random.PRNGKey(0)
    x = jax.random.uniform(key, (2, 4, 16, 16), dtype=jnp.float32)

    loss = edge_map_loss(x, scale=1.0)
    jax.block_until_ready(loss)
    ref = _edge_map_loss_ref(x, scale=1.0)
    assert jnp.allclose(loss, ref, rtol=1e-5, atol=1e-6), (loss, ref)

    # Exercise the folded 1/|scale| path with a non-unit scale.
    loss2 = edge_map_loss(x, scale=2.5)
    jax.block_until_ready(loss2)
    ref2 = _edge_map_loss_ref(x, scale=2.5)
    assert jnp.allclose(loss2, ref2, rtol=1e-5, atol=1e-6), (loss2, ref2)

    print("KERNEL_OK")
</pallas_src>

<mosaic_0001>
module attributes {stable_mosaic.version = 11 : i64} {
  func.func @_edge_map_kernel(%arg0: i32, %arg1: memref<1x4x256xf32, #tpu.memory_space<vmem>>, %arg2: memref<1x256xi32, #tpu.memory_space<vmem>>, %arg3: memref<1x256xi32, #tpu.memory_space<vmem>>, %arg4: memref<1x1xf32, #tpu.memory_space<smem>>, %arg5: memref<1xf32, #tpu.memory_space<smem>>) attributes {dimension_semantics = [#tpu.dimension_semantics<arbitrary>], iteration_bounds = array<i64: 2>, scalar_prefetch = 0 : i64, scratch_operands = 1 : i64, tpu.core_type = #tpu.core_type<tc>, window_params = [{transform_indices = @transform_0, window_bounds = array<i64: 1, 4, 256>}, {pipeline_mode = #tpu.pipeline_mode<synchronous>, transform_indices = @transform_1, window_bounds = array<i64: 1, 256>}, {pipeline_mode = #tpu.pipeline_mode<synchronous>, transform_indices = @transform_2, window_bounds = array<i64: 1, 256>}, {transform_indices = @transform_3, window_bounds = array<i64: 1, 1>}]} {
    %c0_i32 = arith.constant 0 : i32
    %0 = arith.cmpi eq, %arg0, %c0_i32 : i32
    %1 = arith.extui %0 : i1 to i32
    %c0_i32_0 = arith.constant 0 : i32
    %2 = arith.cmpi ne, %1, %c0_i32_0 : i32
    scf.if %2 {
      %cst_26 = arith.constant 0.000000e+00 : f32
      %c0_27 = arith.constant 0 : index
      %86 = memref.load %arg5[%c0_27] : memref<1xf32, #tpu.memory_space<smem>>
      memref.store %cst_26, %arg5[%c0_27] : memref<1xf32, #tpu.memory_space<smem>>
    } else {
    }
    %c0 = arith.constant 0 : index
    %c0_1 = arith.constant 0 : index
    %c0_2 = arith.constant 0 : index
    %3 = vector.load %arg1[%c0, %c0_1, %c0_2] : memref<1x4x256xf32, #tpu.memory_space<vmem>>, vector<1x4x256xf32>
    %4 = vector.shape_cast %3 : vector<1x4x256xf32> to vector<4x256xf32>
    %c0_3 = arith.constant 0 : index
    %c0_4 = arith.constant 0 : index
    %5 = vector.load %arg2[%c0_3, %c0_4] : memref<1x256xi32, #tpu.memory_space<vmem>>, vector<1x256xi32>
    %c0_5 = arith.constant 0 : index
    %c0_6 = arith.constant 0 : index
    %6 = vector.load %arg3[%c0_5, %c0_6] : memref<1x256xi32, #tpu.memory_space<vmem>>, vector<1x256xi32>
    %c1_i32 = arith.constant 1 : i32
    %7 = tpu.dynamic_rotate %4 by %c1_i32 dim 1 : vector<4x256xf32>, i32 -> vector<4x256xf32>
    %c1_i32_7 = arith.constant 1 : i32
    %8 = tpu.dynamic_rotate %5 by %c1_i32_7 dim 1 : vector<1x256xi32>, i32 -> vector<1x256xi32>
    %c1_i32_8 = arith.constant 1 : i32
    %9 = tpu.dynamic_rotate %6 by %c1_i32_8 dim 1 : vector<1x256xi32>, i32 -> vector<1x256xi32>
    %10 = arith.subi %9, %6 : vector<1x256xi32>
    %11 = arith.cmpi eq, %8, %5 : vector<1x256xi32>
    %c1_i32_9 = arith.constant 1 : i32
    %12 = vector.broadcast %c1_i32_9 : i32 to vector<1x256xi32>
    %13 = arith.cmpi eq, %10, %12 : vector<1x256xi32>
    %c-1_i32 = arith.constant -1 : i32
    %14 = vector.broadcast %c-1_i32 : i32 to vector<1x256xi32>
    %15 = arith.cmpi eq, %10, %14 : vector<1x256xi32>
    %16 = arith.ori %13, %15 : vector<1x256xi1>
    %17 = arith.andi %11, %16 : vector<1x256xi1>
    %18 = arith.minsi %6, %9 : vector<1x256xi32>
    %19 = arith.extui %17 : vector<1x256xi1> to vector<1x256xi32>
    %20 = arith.sitofp %19 : vector<1x256xi32> to vector<1x256xf32>
    %c0_i32_10 = arith.constant 0 : i32
    %21 = vector.broadcast %c0_i32_10 : i32 to vector<1x256xi32>
    %22 = arith.cmpi eq, %18, %21 : vector<1x256xi32>
    %23 = arith.extui %22 : vector<1x256xi1> to vector<1x256xi32>
    %24 = arith.sitofp %23 : vector<1x256xi32> to vector<1x256xf32>
    %c14_i32 = arith.constant 14 : i32
    %25 = vector.broadcast %c14_i32 : i32 to vector<1x256xi32>
    %26 = arith.cmpi eq, %18, %25 : vector<1x256xi32>
    %27 = arith.extui %26 : vector<1x256xi1> to vector<1x256xi32>
    %28 = arith.sitofp %27 : vector<1x256xi32> to vector<1x256xf32>
    %29 = arith.addf %24, %28 : vector<1x256xf32>
    %cst = arith.constant 5.000000e-01 : f32
    %30 = vector.broadcast %cst : f32 to vector<1x256xf32>
    %31 = arith.mulf %30, %29 : vector<1x256xf32>
    %cst_11 = arith.constant 1.000000e+00 : f32
    %32 = vector.broadcast %cst_11 : f32 to vector<1x256xf32>
    %33 = arith.addf %32, %31 : vector<1x256xf32>
    %34 = arith.mulf %20, %33 : vector<1x256xf32>
    %35 = arith.subf %7, %4 : vector<4x256xf32>
    %36 = math.absf %35 : vector<4x256xf32>
    %37 = vector.broadcast %34 : vector<1x256xf32> to vector<4x256xf32>
    %38 = arith.mulf %36, %37 : vector<4x256xf32>
    %39 = vector.shape_cast %38 : vector<4x256xf32> to vector<1x4x256xf32>
    %cst_12 = arith.constant dense<0.000000e+00> : vector<1xf32>
    %40 = vector.multi_reduction <add>, %39, %cst_12 [1, 2] : vector<1x4x256xf32> to vector<1xf32>
    %41 = vector.shape_cast %40 : vector<1xf32> to vector<1x1x1xf32>
    %42 = vector.extract %41[0, 0, 0] : f32 from vector<1x1x1xf32>
    %c16_i32 = arith.constant 16 : i32
    %43 = tpu.dynamic_rotate %4 by %c16_i32 dim 1 : vector<4x256xf32>, i32 -> vector<4x256xf32>
    %c16_i32_13 = arith.constant 16 : i32
    %44 = tpu.dynamic_rotate %5 by %c16_i32_13 dim 1 : vector<1x256xi32>, i32 -> vector<1x256xi32>
    %c16_i32_14 = arith.constant 16 : i32
    %45 = tpu.dynamic_rotate %6 by %c16_i32_14 dim 1 : vector<1x256xi32>, i32 -> vector<1x256xi32>
    %46 = arith.subi %44, %5 : vector<1x256xi32>
    %47 = arith.cmpi eq, %45, %6 : vector<1x256xi32>
    %c1_i32_15 = arith.constant 1 : i32
    %48 = vector.broadcast %c1_i32_15 : i32 to vector<1x256xi32>
    %49 = arith.cmpi eq, %46, %48 : vector<1x256xi32>
    %c-1_i32_16 = arith.constant -1 : i32
    %50 = vector.broadcast %c-1_i32_16 : i32 to vector<1x256xi32>
    %51 = arith.cmpi eq, %46, %50 : vector<1x256xi32>
    %52 = arith.ori %49, %51 : vector<1x256xi1>
    %53 = arith.andi %47, %52 : vector<1x256xi1>
    %54 = arith.minsi %5, %44 : vector<1x256xi32>
    %55 = arith.extui %53 : vector<1x256xi1> to vector<1x256xi32>
    %56 = arith.sitofp %55 : vector<1x256xi32> to vector<1x256xf32>
    %c0_i32_17 = arith.constant 0 : i32
    %57 = vector.broadcast %c0_i32_17 : i32 to vector<1x256xi32>
    %58 = arith.cmpi eq, %54, %57 : vector<1x256xi32>
    %59 = arith.extui %58 : vector<1x256xi1> to vector<1x256xi32>
    %60 = arith.sitofp %59 : vector<1x256xi32> to vector<1x256xf32>
    %c14_i32_18 = arith.constant 14 : i32
    %61 = vector.broadcast %c14_i32_18 : i32 to vector<1x256xi32>
    %62 = arith.cmpi eq, %54, %61 : vector<1x256xi32>
    %63 = arith.extui %62 : vector<1x256xi1> to vector<1x256xi32>
    %64 = arith.sitofp %63 : vector<1x256xi32> to vector<1x256xf32>
    %65 = arith.addf %60, %64 : vector<1x256xf32>
    %cst_19 = arith.constant 5.000000e-01 : f32
    %66 = vector.broadcast %cst_19 : f32 to vector<1x256xf32>
    %67 = arith.mulf %66, %65 : vector<1x256xf32>
    %cst_20 = arith.constant 1.000000e+00 : f32
    %68 = vector.broadcast %cst_20 : f32 to vector<1x256xf32>
    %69 = arith.addf %68, %67 : vector<1x256xf32>
    %70 = arith.mulf %56, %69 : vector<1x256xf32>
    %71 = arith.subf %43, %4 : vector<4x256xf32>
    %72 = math.absf %71 : vector<4x256xf32>
    %73 = vector.broadcast %70 : vector<1x256xf32> to vector<4x256xf32>
    %74 = arith.mulf %72, %73 : vector<4x256xf32>
    %75 = vector.shape_cast %74 : vector<4x256xf32> to vector<1x4x256xf32>
    %cst_21 = arith.constant dense<0.000000e+00> : vector<1xf32>
    %76 = vector.multi_reduction <add>, %75, %cst_21 [1, 2] : vector<1x4x256xf32> to vector<1xf32>
    %77 = vector.shape_cast %76 : vector<1xf32> to vector<1x1x1xf32>
    %78 = vector.extract %77[0, 0, 0] : f32 from vector<1x1x1xf32>
    %c0_22 = arith.constant 0 : index
    %79 = memref.load %arg5[%c0_22] : memref<1xf32, #tpu.memory_space<smem>>
    %80 = arith.addf %79, %78 : f32
    %81 = arith.addf %80, %42 : f32
    %c0_23 = arith.constant 0 : index
    %82 = memref.load %arg5[%c0_23] : memref<1xf32, #tpu.memory_space<smem>>
    memref.store %81, %arg5[%c0_23] : memref<1xf32, #tpu.memory_space<smem>>
    %c1_i32_24 = arith.constant 1 : i32
    %83 = arith.cmpi eq, %arg0, %c1_i32_24 : i32
    %84 = arith.extui %83 : i1 to i32
    %c0_i32_25 = arith.constant 0 : i32
    %85 = arith.cmpi ne, %84, %c0_i32_25 : i32
    scf.if %85 {
      %c0_26 = arith.constant 0 : index
      %86 = memref.load %arg5[%c0_26] : memref<1xf32, #tpu.memory_space<smem>>
      %cst_27 = arith.constant 0.001953125 : f32
      %87 = arith.mulf %86, %cst_27 : f32
      %c0_28 = arith.constant 0 : index
      %c0_29 = arith.constant 0 : index
      %88 = memref.load %arg4[%c0_28, %c0_29] : memref<1x1xf32, #tpu.memory_space<smem>>
      memref.store %87, %arg4[%c0_28, %c0_29] : memref<1x1xf32, #tpu.memory_space<smem>>
    } else {
    }
    return
  }
  func.func @transform_0(%arg0: i32) -> (i32, i32, i32) {
    %c0_i32 = arith.constant 0 : i32
    %c0_i32_0 = arith.constant 0 : i32
    %c0_i32_1 = arith.constant 0 : i32
    return %arg0, %c0_i32, %c0_i32_0 : i32, i32, i32
  }
  func.func @transform_1(%arg0: i32) -> (i32, i32) {
    %c0_i32 = arith.constant 0 : i32
    %c0_i32_0 = arith.constant 0 : i32
    %c0_i32_1 = arith.constant 0 : i32
    return %c0_i32, %c0_i32_0 : i32, i32
  }
  func.func @transform_2(%arg0: i32) -> (i32, i32) {
    %c0_i32 = arith.constant 0 : i32
    %c0_i32_0 = arith.constant 0 : i32
    %c0_i32_1 = arith.constant 0 : i32
    return %c0_i32, %c0_i32_0 : i32, i32
  }
  func.func @transform_3(%arg0: i32) -> (i32, i32) {
    %c0_i32 = arith.constant 0 : i32
    %c0_i32_0 = arith.constant 0 : i32
    %c0_i32_1 = arith.constant 0 : i32
    return %c0_i32, %c0_i32_0 : i32, i32
  }
}

</mosaic_0001>

<llo_original>
// kernel: tpu_custom_call.1
$region0: #{tpu_custom_call.1}
  #allocation0 [shape = 'u32[]', space=smem, size = 0x4, offset = 0x4, fixed_abs, tag = 'smem constant byte address 0x4 - core index']
  #allocation1 [shape = 'u32[144,128]{1,0:T(1,128)}', space=vmem, size = 0x12000, scoped, tag = 'internal scratch']
  #allocation2 [shape = 'f32[1]{0:T(128)}', space=smem, size = 0x200, scoped, tag = 'scratch operand']
  %s0 = inlined_call_operand.hbm [shape: f32[2,4,256], index: 0, kind: input, shape index: {}]
  %s1 = inlined_call_operand.hbm [shape: s32[1,256], index: 1, kind: input, shape index: {}]
  %s2 = inlined_call_operand.vmem [shape: s32[1,256], index: 2, kind: input, shape index: {}]
  %s3 = inlined_call_operand.hbm [shape: f32[1,1], index: 3, kind: output, shape index: {}]
  %s4 = sld [smem:[#allocation0]]
  $region61: #{tpu_custom_call.1} parent=0
    _
  %s6 = ssub.s32 1, %s4
  %s7 = scalar_select 0, %s6, %s4
  $region1: #{tpu_custom_call.1} parent=0
    #allocation3 [shape = 'u8[8192]{0}', space=vmem, size = 0x2000, scoped, tag = 'input window, operand 0']
    #allocation4 [shape = 's32[2]{0}', space=sflag, size = 0x8, scoped, tag = 'scoped memory for tpu_custom_call.1']
    #allocation5 [shape = 's32[2]{0}', space=sflag, size = 0x8, scoped, tag = 'scoped memory for tpu_custom_call.1']
    #allocation6 [shape = 'u8[1024]{0}', space=vmem, size = 0x400, scoped, tag = 'input window, operand 1, single buffered']
    #allocation7 [shape = 's32[1]{0}', space=sflag, size = 0x4, scoped, tag = 'scoped memory for tpu_custom_call.1']
    #allocation8 [shape = 'u8[512]{0}', space=smem, size = 0x200, scoped, tag = 'output window, operand 0, single buffered']
    %8 = vsyncpa [#allocation4], 0
    %s9 = scalar_lea.sflag [#allocation4], 1
    %10 = vsyncpa %s9, 0
    %11 = vsyncpa [#allocation7], 0
    %12 = vsyncpa [#allocation5], 0
    loop: start=0, step=1, limit=4
    $region2: #{tpu_custom_call.1} parent=1 // loop_pre_header
      _
    $region3: #{tpu_custom_call.1} parent=1 // loop_header
      %s14 = sphi 0, %s18
      %p15 = scmp.ge.s32.totalorder %s14, 4
      %s24 = sphi 0, %s26
      %s27 = sphi 0, %s24
      %s28 = sphi 0, %s27
      %s44 = sphi 0, %s28
      %s48 = sphi 0, %s48
      %s50 = sphi 0, %s48
      %s51 = sphi 0, %s50
      %s65 = sphi 0, %s51
      %s69 = sphi 0, %s69
      %s71 = sphi 0, %s69
      %s72 = sphi 0, %s71
      %s86 = sphi 0, %s72
      %s90 = sphi 0, %s90
      %s92 = sphi 0, %s90
      %s93 = sphi 0, %s92
      %s107 = sphi 0, %s93
    $region4: #{tpu_custom_call.1} parent=1 // loop_header_branch
      %17 = sbr.rel (%p15) target = $region8
    $region5: #{tpu_custom_call.1} parent=1 // loop_body
      %s19 = ssub.s32 %s14, 1
      %s20 = ssub.s32 %s14, 2
      %s21 = sadd.s32 %s14, 1
      %s22 = ssub.s32 %s14, %s21
      %p23 = scmp.eq.s32.totalorder %s22, 0
      %s25 = sadd.s32 %s24, 1
      %s26 = scalar_select %p23, %s24, %s25
      %p29 = pneg %p23
      %p30 = scmp.eq.s32.totalorder %s14, 1
      %p31 = por %p29, %p30
      %p32 = scmp.ne.s32.totalorder %s24, %s27
      %p33 = scmp.eq.s32.totalorder %s14, 0
      %p34 = por %p32, %p33
      %p35 = scmp.ne.s32.totalorder %s24, %s27
      %p36 = scmp.eq.s32.totalorder %s19, 1
      %p37 = por %p35, %p36
      %p38 = scmp.ne.s32.totalorder %s27, %s28
      %p39 = scmp.eq.s32.totalorder %s19, 0
      %p40 = por %p38, %p39
      %p41 = scmp.ne.s32.totalorder %s27, %s28
      %p42 = scmp.eq.s32.totalorder %s20, 1
      %p43 = por %p41, %p42
      %p45 = scmp.ne.s32.totalorder %s28, %s44
      %p46 = scmp.eq.s32.totalorder %s20, 0
      %p47 = por %p45, %p46
      %s49 = sadd.s32 %s48, 1
      %p52 = scmp.eq.s32.totalorder %s14, 1
      %p53 = scmp.ne.s32.totalorder %s48, %s50
      %p54 = scmp.eq.s32.totalorder %s14, 0
      %p55 = por %p53, %p54
      %p56 = scmp.ne.s32.totalorder %s48, %s50
      %p57 = scmp.eq.s32.totalorder %s19, 1
      %p58 = por %p56, %p57
      %p59 = scmp.ne.s32.totalorder %s50, %s51
      %p60 = scmp.eq.s32.totalorder %s19, 0
      %p61 = por %p59, %p60
      %p62 = scmp.ne.s32.totalorder %s50, %s51
      %p63 = scmp.eq.s32.totalorder %s20, 1
      %p64 = por %p62, %p63
      %p66 = scmp.ne.s32.totalorder %s51, %s65
      %p67 = scmp.eq.s32.totalorder %s20, 0
      %p68 = por %p66, %p67
      %s70 = sadd.s32 %s69, 1
      %p73 = scmp.eq.s32.totalorder %s14, 1
      %p74 = scmp.ne.s32.totalorder %s69, %s71
      %p75 = scmp.eq.s32.totalorder %s14, 0
      %p76 = por %p74, %p75
      %p77 = scmp.ne.s32.totalorder %s69, %s71
      %p78 = scmp.eq.s32.totalorder %s19, 1
      %p79 = por %p77, %p78
      %p80 = scmp.ne.s32.totalorder %s71, %s72
      %p81 = scmp.eq.s32.totalorder %s19, 0
      %p82 = por %p80, %p81
      %p83 = scmp.ne.s32.totalorder %s71, %s72
      %p84 = scmp.eq.s32.totalorder %s20, 1
      %p85 = por %p83, %p84
      %p87 = scmp.ne.s32.totalorder %s72, %s86
      %p88 = scmp.eq.s32.totalorder %s20, 0
      %p89 = por %p87, %p88
      %s91 = sadd.s32 %s90, 1
      %p94 = scmp.eq.s32.totalorder %s14, 1
      %p95 = scmp.ne.s32.totalorder %s90, %s92
      %p96 = scmp.eq.s32.totalorder %s14, 0
      %p97 = por %p95, %p96
      %p98 = scmp.ne.s32.totalorder %s90, %s92
      %p99 = scmp.eq.s32.totalorder %s19, 1
      %p100 = por %p98, %p99
      %p101 = scmp.ne.s32.totalorder %s92, %s93
      %p102 = scmp.eq.s32.totalorder %s19, 0
      %p103 = por %p101, %p102
      %p104 = scmp.ne.s32.totalorder %s92, %s93
      %p105 = scmp.eq.s32.totalorder %s20, 1
      %p106 = por %p104, %p105
      %p108 = scmp.ne.s32.totalorder %s93, %s107
      %p109 = scmp.eq.s32.totalorder %s20, 0
      %p110 = por %p108, %p109
      %p111 = scmp.le.s32.totalorder 1, %s14
      %p112 = scmp.lt.s32.totalorder %s14, 3
      %p113 = pnand %p111, %p112
      %p114 = pneg %p113
      // Predicated region
      $region9: #{tpu_custom_call.1} parent=5 // pred_check
        _
      $region10: #{tpu_custom_call.1} parent=5 // pred_check_branch
        %116 = sbr.rel (%p113) target = $region12
      $region11: #{tpu_custom_call.1} parent=5 // pred_region
        %s117 = ssub.s32 %s14, 1
        // Predicated region
        $region13: #{tpu_custom_call.1} parent=11 // pred_check
          %p118 = pneg %p61
        $region14: #{tpu_custom_call.1} parent=11 // pred_check_branch
          %120 = sbr.rel (%p118) target = $region16
        $region15: #{tpu_custom_call.1} parent=11 // pred_region
          %s122 = ssub.s32 32, 32
          %123 = vsyncadd [#allocation7], %s122
          %s125 = sshll.u32 [#allocation6], 4
          %s126 = int_to_ptr.vmem [resolvable:$true] %s125
          %128 = dma.hbm_to_vmem [thread:$0]  %s1, 32, %s126, [#allocation7]
        $region16: #{tpu_custom_call.1} parent=11 // pred_fallthru
          _
        // Predicated region
        $region17: #{tpu_custom_call.1} parent=11 // pred_check
          %p129 = pneg %p82
        $region18: #{tpu_custom_call.1} parent=11 // pred_check_branch
          %131 = sbr.rel (%p129) target = $region20
        $region19: #{tpu_custom_call.1} parent=11 // pred_region
          _
        $region20: #{tpu_custom_call.1} parent=11 // pred_fallthru
          _
      $region12: #{tpu_custom_call.1} parent=5 // pred_fallthru
        _
      %p132 = scmp.lt.s32.totalorder %s14, 2
      // Predicated region
      $region21: #{tpu_custom_call.1} parent=5 // pred_check
        %p133 = pneg %p132
      $region22: #{tpu_custom_call.1} parent=5 // pred_check_branch
        %135 = sbr.rel (%p133) target = $region24
      $region23: #{tpu_custom_call.1} parent=5 // pred_region
        // Predicated region
        $region25: #{tpu_custom_call.1} parent=23 // pred_check
          %p136 = pneg %p34
        $region26: #{tpu_custom_call.1} parent=23 // pred_check_branch
          %138 = sbr.rel (%p136) target = $region28
        $region27: #{tpu_custom_call.1} parent=23 // pred_region
          %s139 = sand.u32 %s24, 1
          %s140 = scalar_lea.sflag [#allocation4], %s139
          %s141 = sand.u32 %s24, 1
          %s142 = smul.addr %s141, 8
          %s143 = scalar_lea.vmem [#allocation3], %s142
          %s145 = ssub.s32 128, 128
          %146 = vsyncadd %s140, %s145
          %s147 = smul.addr %s14, 2
          %s148 = smul.addr %s147, 64
          %s149 = scalar_lea.hbm %s0, %s148
          %s151 = sshll.u32 %s143, 4
          %s152 = int_to_ptr.vmem [resolvable:$true] %s151
          %154 = dma.hbm_to_vmem [thread:$0]  %s149, 128, %s152, %s140
        $region28: #{tpu_custom_call.1} parent=23 // pred_fallthru
          _
      $region24: #{tpu_custom_call.1} parent=5 // pred_fallthru
        _
      %p155 = scmp.le.s32.totalorder 1, %s14
      %p156 = scmp.lt.s32.totalorder %s14, 3
      %p157 = pnand %p155, %p156
      %p158 = pneg %p157
      // Predicated region
      $region29: #{tpu_custom_call.1} parent=5 // pred_check
        _
      $region30: #{tpu_custom_call.1} parent=5 // pred_check_branch
        %160 = sbr.rel (%p157) target = $region32
      $region31: #{tpu_custom_call.1} parent=5 // pred_region
        %s161 = ssub.s32 %s14, 1
        %s162 = sand.u32 %s27, 1
        %s163 = scalar_lea.sflag [#allocation4], %s162
        %s164 = sand.u32 %s27, 1
        %s165 = smul.addr %s164, 8
        %s166 = scalar_lea.vmem [#allocation3], %s165
        // Predicated region
        $region33: #{tpu_custom_call.1} parent=31 // pred_check
          %p167 = pneg %p40
        $region34: #{tpu_custom_call.1} parent=31 // pred_check_branch
          %169 = sbr.rel (%p167) target = $region36
        $region35: #{tpu_custom_call.1} parent=31 // pred_region
          %170 = dma.done %s163, 128
        $region36: #{tpu_custom_call.1} parent=31 // pred_fallthru
          _
        // Predicated region
        $region37: #{tpu_custom_call.1} parent=31 // pred_check
          %p171 = pneg %p61
        $region38: #{tpu_custom_call.1} parent=31 // pred_check_branch
          %173 = sbr.rel (%p171) target = $region40
        $region39: #{tpu_custom_call.1} parent=31 // pred_region
          %174 = dma.done [#allocation7], 32
        $region40: #{tpu_custom_call.1} parent=31 // pred_fallthru
          _
        %s175 = sand.u32 %s27, 1
        %s176 = scalar_lea.sflag [#allocation4], %s175
        %s177 = sand.u32 %s27, 1
        %s178 = smul.addr %s177, 8
        %s179 = scalar_lea.vmem [#allocation3], %s178
        %p180 = pneg %p40
        %p181 = pneg %p37
        %p182 = pneg %p61
        %p183 = pneg %p58
        %p184 = pneg %p82
        %p185 = pneg %p79
        %p186 = pneg %p103
        %p187 = pneg %p100
        %p188 = scmp.eq.s32.totalorder %s19, 0
        // Predicated region
        $region41: #{tpu_custom_call.1} parent=31 // pred_check
          %p189 = pneg %p188
        $region42: #{tpu_custom_call.1} parent=31 // pred_check_branch
          %191 = sbr.rel (%p189) target = $region44
        $region43: #{tpu_custom_call.1} parent=31 // pred_region
          %s192 = scalar_lea.smem [#allocation2], 0
          %193 = sst [smem:[%s192]] 0.0
        $region44: #{tpu_custom_call.1} parent=31 // pred_fallthru
          _
        %v194 = vld [vmem:[%s166] sm:$0xff]
        %v195 = vld [vmem:[#allocation6] sm:$0x3]
        %v196 = vld [vmem:[%s2] sm:$0x3]
        %v198 = vcombine.high %v194, %v194
        %200 = vrot.lane.b32.xlu0 %v194, 1
        %v201 = vpop.permute.xlu0 %200
        %202 = vrot.lane.b32.xlu0 %v198, 1
        %v203 = vpop.permute.xlu0 %202
        %v204 = vlaneseq
        %v205 = vand.u32 %v204, 127
        %vm206 = vcmp.lt.s32.totalorder %v205, 1
        %v207 = vsel %vm206, %v201, %v203
        %v208 = vsel %vm206, %v203, %v201
        %v209 = vlaneseq
        %v210 = vshrl.u32 %v209, 7
        %v211 = vsub.s32 0, %v210
        %v212 = vrot.slane %v195, %v211
        %v213 = vlaneseq
        %v214 = vshrl.u32 %v213, 7
        %v215 = vsub.s32 1, %v214
        %v216 = vrot.slane %v195, %v215
        %217 = vrot.lane.b32.xlu0 %v212, 1
        %v218 = vpop.permute.xlu0 %217
        %219 = vrot.lane.b32.xlu0 %v216, 1
        %v220 = vpop.permute.xlu0 %219
        %v221 = vsel %vm206, %v218, %v220
        %v222 = vsel %vm206, %v220, %v218
        %v223 = vlaneseq
        %v224 = vshrl.u32 %v223, 7
        %v225 = vsub.s32 0, %v224
        %v226 = vrot.slane %v196, %v225
        %v227 = vlaneseq
        %v228 = vshrl.u32 %v227, 7
        %v229 = vsub.s32 1, %v228
        %v230 = vrot.slane %v196, %v229
        %231 = vrot.lane.b32.xlu0 %v226, 1
        %v232 = vpop.permute.xlu0 %231
        %233 = vrot.lane.b32.xlu0 %v230, 1
        %v234 = vpop.permute.xlu0 %233
        %v235 = vsel %vm206, %v232, %v234
        %v236 = vsel %vm206, %v234, %v232
        %v237 = vsub.s32 %v236, %v226
        %v238 = vsub.s32 %v235, %v230
        %vm239 = vcmp.eq.s32.totalorder %v222, %v212
        %vm240 = vcmp.eq.s32.totalorder %v221, %v216
        %vm241 = vcmp.eq.s32.totalorder %v237, 1
        %vm242 = vcmp.eq.s32.totalorder %v238, 1
        %vm243 = vcmp.eq.s32.totalorder %v237, 4294967295
        %vm244 = vcmp.eq.s32.totalorder %v238, 4294967295
        %vm245 = vmor %vm241, %vm243
        %vm246 = vmor %vm242, %vm244
        %vm247 = vmand %vm239, %vm245
        %vm248 = vmand %vm240, %vm246
        %v249 = vcombine.low %v236, %v235
        %v251 = vunpack.c.l.s4 1966171168
        %v252 = vunpack.c.0.s8 %v251
        %v253 = vlaneseq
        %v254 = vshrl.u32 %v253, 7
        %v255 = vsub.s32 %v252, %v254
        %v256 = vrot.slane %v249, %v255
        %v258 = vunpack.c.l.s4 1966171168
        %v259 = vunpack.c.0.s8 %v258
        %v260 = vlaneseq
        %v261 = vshrl.u32 %v260, 7
        %v262 = vsub.s32 %v259, %v261
        %v263 = vrot.slane %v256, %v262
        %vm264 = vcmp.lt.s32.totalorder %v196, %v263
        %v265 = vsel %vm264, %v196, %v263
        %v266 = vsel %vm247, 1, 0
        %v267 = vsel %vm248, 1, 0
        %v268 = vcvt.s32.f32 %v266
        %v269 = vcvt.s32.f32 %v267
        %vm270 = vcmp.eq.s32.totalorder %v265, 0
        %v271 = vsel %vm270, 1, 0
        %v272 = vcvt.s32.f32 %v271
        %vm273 = vcmp.eq.s32.totalorder %v265, 14
        %v274 = vsel %vm273, 1, 0
        %v275 = vcvt.s32.f32 %v274
        %v276 = vadd.f32 %v272, %v275
        %v277 = vmul.f32 %v276, 0.5
        %v278 = vadd.f32 %v277, 1.0
        %v280 = vlaneseq
        %v281 = vshrl.u32 %v280, 7
        %v282 = vsub.s32 0, %v281
        %v283 = vrot.slane %v278, %v282
        %v284 = vlaneseq
        %v285 = vshrl.u32 %v284, 7
        %v286 = vsub.s32 1, %v285
        %v287 = vrot.slane %v278, %v286
        %v290 = vmul.f32 %v268, %v283
        %v291 = vmul.f32 %v269, %v287
        %v292 = vsub.f32 %v208, %v194
        %v293 = vsub.f32 %v207, %v198
        %v294 = vand.u32 2147483647, %v292
        %v295 = vand.u32 2147483647, %v293
        %v296 = vlaneseq
        %v297 = vshrl.u32 %v296, 7
        %v298 = vsub.s32 0, %v297
        %v299 = vrot.slane %v290, %v298
        %v300 = vlaneseq
        %v301 = vshrl.u32 %v300, 7
        %v302 = vsub.s32 0, %v301
        %v303 = vrot.slane %v291, %v302
        %v304 = vmul.f32 %v294, %v299
        %v305 = vmul.f32 %v295, %v303
        %vm306 = vcmask 1043456
        %v307 = vsel %vm306, %v304, 0.0
        %v308 = vsel %vm306, %v305, 0.0
        %v309 = vadd.f32 %v307, %v308
        %310 = vadd.xlane.f32.xlu0 %v309
        %v311 = vpop.xlane.xlu0 %310
        %v312 = vrot.slane %v311, 4
        %v313 = vadd.f32 %v311, %v312
        %v314 = vrot.slane %v313, 2
        %v315 = vadd.f32 %v313, %v314
        %v316 = vrot.slane %v315, 1
        %v317 = vadd.f32 %v315, %v316
        %s318 = vtos %v317
        %319 = vrot.lane.b32.xlu0 %v194, 16
        %v320 = vpop.permute.xlu0 %319
        %321 = vrot.lane.b32.xlu0 %v198, 16
        %v322 = vpop.permute.xlu0 %321
        %vm323 = vcmp.lt.s32.totalorder %v205, 16
        %v324 = vsel %vm323, %v320, %v322
        %v325 = vsel %vm323, %v322, %v320
        %326 = vrot.lane.b32.xlu0 %v212, 16
        %v327 = vpop.permute.xlu0 %326
        %328 = vrot.lane.b32.xlu0 %v216, 16
        %v329 = vpop.permute.xlu0 %328
        %v330 = vsel %vm323, %v327, %v329
        %v331 = vsel %vm323, %v329, %v327
        %332 = vrot.lane.b32.xlu0 %v226, 16
        %v333 = vpop.permute.xlu0 %332
        %334 = vrot.lane.b32.xlu0 %v230, 16
        %v335 = vpop.permute.xlu0 %334
        %v336 = vsel %vm323, %v333, %v335
        %v337 = vsel %vm323, %v335, %v333
        %v338 = vsub.s32 %v331, %v212
        %v339 = vsub.s32 %v330, %v216
        %vm340 = vcmp.eq.s32.totalorder %v337, %v226
        %vm341 = vcmp.eq.s32.totalorder %v336, %v230
        %vm342 = vcmp.eq.s32.totalorder %v338, 1
        %vm343 = vcmp.eq.s32.totalorder %v339, 1
        %vm344 = vcmp.eq.s32.totalorder %v338, 4294967295
        %vm345 = vcmp.eq.s32.totalorder %v339, 4294967295
        %vm346 = vmor %vm342, %vm344
        %vm347 = vmor %vm343, %vm345
        %vm348 = vmand %vm340, %vm346
        %vm349 = vmand %vm341, %vm347
        %v350 = vcombine.low %v331, %v330
        %v352 = vunpack.c.l.s4 1966171168
        %v353 = vunpack.c.0.s8 %v352
        %v354 = vlaneseq
        %v355 = vshrl.u32 %v354, 7
        %v356 = vsub.s32 %v353, %v355
        %v357 = vrot.slane %v350, %v356
        %v359 = vunpack.c.l.s4 1966171168
        %v360 = vunpack.c.0.s8 %v359
        %v361 = vlaneseq
        %v362 = vshrl.u32 %v361, 7
        %v363 = vsub.s32 %v360, %v362
        %v364 = vrot.slane %v357, %v363
        %vm365 = vcmp.lt.s32.totalorder %v195, %v364
        %v366 = vsel %vm365, %v195, %v364
        %v367 = vsel %vm348, 1, 0
        %v368 = vsel %vm349, 1, 0
        %v369 = vcvt.s32.f32 %v367
        %v370 = vcvt.s32.f32 %v368
        %vm371 = vcmp.eq.s32.totalorder %v366, 0
        %v372 = vsel %vm371, 1, 0
        %v373 = vcvt.s32.f32 %v372
        %vm374 = vcmp.eq.s32.totalorder %v366, 14
        %v375 = vsel %vm374, 1, 0
        %v376 = vcvt.s32.f32 %v375
        %v377 = vadd.f32 %v373, %v376
        %v378 = vmul.f32 %v377, 0.5
        %v379 = vadd.f32 %v378, 1.0
        %v381 = vlaneseq
        %v382 = vshrl.u32 %v381, 7
        %v383 = vsub.s32 0, %v382
        %v384 = vrot.slane %v379, %v383
        %v385 = vlaneseq
        %v386 = vshrl.u32 %v385, 7
        %v387 = vsub.s32 1, %v386
        %v388 = vrot.slane %v379, %v387
        %v391 = vmul.f32 %v369, %v384
        %v392 = vmul.f32 %v370, %v388
        %v393 = vsub.f32 %v325, %v194
        %v394 = vsub.f32 %v324, %v198
        %v395 = vand.u32 2147483647, %v393
        %v396 = vand.u32 2147483647, %v394
        %v397 = vlaneseq
        %v398 = vshrl.u32 %v397, 7
        %v399 = vsub.s32 0, %v398
        %v400 = vrot.slane %v391, %v399
        %v401 = vlaneseq
        %v402 = vshrl.u32 %v401, 7
        %v403 = vsub.s32 0, %v402
        %v404 = vrot.slane %v392, %v403
        %v405 = vmul.f32 %v395, %v400
        %v406 = vmul.f32 %v396, %v404
        %v407 = vsel %vm306, %v405, 0.0
        %v408 = vsel %vm306, %v406, 0.0
        %v409 = vadd.f32 %v407, %v408
        %410 = vadd.xlane.f32.xlu0 %v409
        %v411 = vpop.xlane.xlu0 %410
        %v412 = vrot.slane %v411, 4
        %v413 = vadd.f32 %v411, %v412
        %v414 = vrot.slane %v413, 2
        %v415 = vadd.f32 %v413, %v414
        %v416 = vrot.slane %v415, 1
        %v417 = vadd.f32 %v415, %v416
        %s418 = vtos %v417
        %s419 = sld [smem:[#allocation2]]
        %s420 = sadd.f32 %s419, %s418
        %s421 = sadd.f32 %s420, %s318
        %s422 = scalar_lea.smem [#allocation2], 0
        %423 = sst [smem:[%s422]] %s421
        %p424 = scmp.eq.s32.totalorder %s19, 1
        // Predicated region
        $region45: #{tpu_custom_call.1} parent=31 // pred_check
          %p425 = pneg %p424
        $region46: #{tpu_custom_call.1} parent=31 // pred_check_branch
          %427 = sbr.rel (%p425) target = $region48
        $region47: #{tpu_custom_call.1} parent=31 // pred_region
          %s428 = sld [smem:[#allocation2]]
          %s429 = smul.f32 %s428, 0.001953125
          %s430 = scalar_lea.smem [#allocation8], 0
          %431 = sst [smem:[%s430]] %s429
        $region48: #{tpu_custom_call.1} parent=31 // pred_fallthru
          _
        // Predicated region
        $region49: #{tpu_custom_call.1} parent=31 // pred_check
          %p432 = pneg %p100
        $region50: #{tpu_custom_call.1} parent=31 // pred_check_branch
          %434 = sbr.rel (%p432) target = $region52
        $region51: #{tpu_custom_call.1} parent=31 // pred_region
          %s436 = ssub.s32 16, 16
          %437 = vsyncadd [#allocation5], %s436
          %440 = dma.smem_to_hbm [#allocation8], 16, %s3, [#allocation5]
        $region52: #{tpu_custom_call.1} parent=31 // pred_fallthru
          _
        // Predicated region
        $region53: #{tpu_custom_call.1} parent=31 // pred_check
          %p441 = pneg %p100
        $region54: #{tpu_custom_call.1} parent=31 // pred_check_branch
          %443 = sbr.rel (%p441) target = $region56
        $region55: #{tpu_custom_call.1} parent=31 // pred_region
          %444 = dma.done [#allocation5], 16
        $region56: #{tpu_custom_call.1} parent=31 // pred_fallthru
          _
        %445 = sfence
      $region32: #{tpu_custom_call.1} parent=5 // pred_fallthru
        _
      %p446 = scmp.le.s32.totalorder 2, %s14
      // Predicated region
      $region57: #{tpu_custom_call.1} parent=5 // pred_check
        %p447 = pneg %p446
      $region58: #{tpu_custom_call.1} parent=5 // pred_check_branch
        %449 = sbr.rel (%p447) target = $region60
      $region59: #{tpu_custom_call.1} parent=5 // pred_region
        %s450 = ssub.s32 %s14, 2
      $region60: #{tpu_custom_call.1} parent=5 // pred_fallthru
        _
    $region6: #{tpu_custom_call.1} parent=1 // loop_footer
      %s18 = sadd.s32 1, %s14
    $region7: #{tpu_custom_call.1} parent=1 // loop_footer_branch
      %13 = sbr.rel target = $region3
    $region8: #{tpu_custom_call.1} parent=1 // loop_exit
      _
    %451 = vsyncpa [#allocation4], 1
    %s452 = scalar_lea.sflag [#allocation4], 1
    %453 = vsyncpa %s452, 1
    %454 = vsyncpa [#allocation7], 1
    %455 = vsyncpa [#allocation5], 1
    %s456 = scalar_lea.sflag [#allocation5], 1
    %457 = vsyncpa %s456, 1

</llo_original>
